<compile_context>
chip_gen: v7x
topology: tpu7x:2x2x1
jax: 0.10.0
libtpu: 0.0.40
codegen_flags: <defaults>
</compile_context>

<pallas_src>
import functools

import numpy as np
import jax
import jax.numpy as jnp
from jax.experimental import pallas as pl
from jax.experimental.pallas import tpu as pltpu


# ----------------------------- point-cloud loss ------------------------------

def _pc_kernel(a_ref, pc_ref, out_ref, *, inv_n):
    """Partial of sum_b mean_n || (M_inv_b - I) @ pc_bn || for one (b, N-tile)."""
    a = a_ref[0]                       # (4, 4)  = inv(RT_total) - I for this b
    p = pc_ref[0]                      # (4, tile_n) homogeneous points
    # diff = (M_inv - I) @ p as VPU broadcast-FMAs; a 4x4 matmul would waste the
    # MXU (K = M = 4 padded to 128/256) and need an XLU axis-0 reduce.
    d = (a[:, 0:1] * p[0:1, :] + a[:, 1:2] * p[1:2, :]
         + a[:, 2:3] * p[2:3, :] + a[:, 3:4] * p[3:4, :])    # (4, tile_n)
    # Row 3 of (M_inv - I) is exactly zero (rigid transform), so only rows 0..2
    # contribute to the per-point L2 norm (matches torch .norm(dim=0)).
    d0 = d[0:1, :]
    d1 = d[1:2, :]
    d2 = d[2:3, :]
    # NOTE: forward-only. sqrt has an unbounded gradient at 0; add an epsilon if
    # this kernel is ever differentiated.
    err = jnp.sqrt(d0 * d0 + d1 * d1 + d2 * d2)              # (1, tile_n)
    part = jnp.sum(err, axis=1, keepdims=True) * inv_n       # (1, 1)
    # Replicate the partial over a full (8,128) tile: lane-dense unmasked store
    # and an independent output block per grid step (both axes "parallel").
    out_ref[...] = jnp.broadcast_to(part, (8, 128))


def _pick_tile_n(n_points, cap=8192):
    cands = [d for d in range(128, min(n_points, cap) + 1, 128)
             if n_points % d == 0]
    return max(cands) if cands else 128


def point_cloud_loss(a_minus_i, point_clouds):
    """sum_b mean_n || inv(RT_total_b) @ pc_bn - pc_bn ||  (rotate_forward)."""
    B, four, N = point_clouds.shape
    assert four == 4 and N % 128 == 0
    tile_n = _pick_tile_n(N)
    n_blocks = N // tile_n
    kernel = functools.partial(_pc_kernel, inv_n=1.0 / N)
    out = pl.pallas_call(
        kernel,
        out_shape=jax.ShapeDtypeStruct((B * 8, n_blocks * 128), jnp.float32),
        grid_spec=pltpu.PrefetchScalarGridSpec(
            num_scalar_prefetch=0,
            grid=(B, n_blocks),
            in_specs=[
                pl.BlockSpec((1, 4, 4), lambda b, n: (b, 0, 0)),
                pl.BlockSpec((1, 4, tile_n), lambda b, n: (b, 0, n)),
            ],
            out_specs=pl.BlockSpec((8, 128), lambda b, n: (b, n)),
        ),
        compiler_params=pltpu.CompilerParams(
            dimension_semantics=("parallel", "parallel"),
            vmem_limit_bytes=32 * 1024 * 1024),
        cost_estimate=pl.CostEstimate(
            flops=int(B * N * 12),
            transcendentals=int(B * N),
            bytes_accessed=int(B * (4 * N + 16) * 4 + B * 8 * n_blocks * 128 * 4)),
    )(a_minus_i, point_clouds)
    # One representative element per (8,128) partial block.
    return jnp.sum(out[0::8, 0::128])


# --------------------------------- flow loss ---------------------------------

def _flow_kernel(w_ref, p_ref, g_ref, v_ref, out_ref, *, channels, inv_numel):
    """Partial of sum_t w_t * mean(valid_t * |pred_t - gt_t|) for one (b, T-chunk)."""
    p = p_ref[0]                            # (tile_t, C*H*W)
    g = g_ref[0]
    v = v_ref[0]                            # (tile_t, H*W)
    vfull = jnp.tile(v, (1, channels))      # broadcast valid over C in VMEM
    d = jnp.abs(p - g) * vfull              # (tile_t, C*H*W)
    per_t = jnp.sum(d, axis=1, keepdims=True)                         # (tile_t, 1)
    part = jnp.sum(per_t * w_ref[...], axis=0, keepdims=True) * inv_numel  # (1, 1)
    out_ref[...] = jnp.broadcast_to(part, (8, 128))


def _pick_tile_t(T, bytes_per_t, *, vmem_budget=12 * 1024 * 1024, min_chunks=4):
    # Divisors of T that keep the second-minor block dim 8-aligned (or cover T),
    # fit the double-buffered VMEM budget, and leave enough chunk granularity
    # for skipping zero-weight chunks.
    aligned = [d for d in range(1, T + 1) if T % d == 0 and (d % 8 == 0 or d == T)]
    fits = [d for d in aligned if 2 * d * bytes_per_t <= vmem_budget]
    if not fits:
        return min(aligned)
    capped = [d for d in fits if d <= max(T // min_chunks, 1)]
    return max(capped) if capped else min(fits)


def flow_loss_fn(weights_f32, pred, gt, valid, channels, numel):
    """sum_i w_i * mean(valid_i * |pred_i - gt_i|) with f32 gamma weights."""
    B, T, M = pred.shape
    HW = valid.shape[2]
    # In f32 (matching torch's python-float * f32-tensor product) the early
    # gamma**(T-1-i) weights underflow to exactly 0.0, so those T-chunks
    # contribute exactly nothing for finite pred/gt -> skip them entirely via a
    # static grid offset (free ~2x HBM-traffic cut for gamma=0.8, T=1000).
    nz = np.nonzero(weights_f32 > 0.0)[0]
    if nz.size == 0:
        return jnp.float32(0.0)
    bytes_per_t = (2 * M + HW) * 4
    tile_t = _pick_tile_t(T, bytes_per_t)
    start_chunk = int(nz[0]) // tile_t
    n_chunks = T // tile_t - start_chunk
    w = jnp.asarray(weights_f32).reshape(T, 1)
    kernel = functools.partial(_flow_kernel, channels=channels,
                               inv_numel=1.0 / numel)
    out = pl.pallas_call(
        kernel,
        out_shape=jax.ShapeDtypeStruct((B * 8, n_chunks * 128), jnp.float32),
        grid_spec=pltpu.PrefetchScalarGridSpec(
            num_scalar_prefetch=0,
            grid=(B, n_chunks),
            in_specs=[
                pl.BlockSpec((tile_t, 1), lambda b, t: (t + start_chunk, 0)),
                pl.BlockSpec((1, tile_t, M), lambda b, t: (b, t + start_chunk, 0)),
                pl.BlockSpec((1, tile_t, M), lambda b, t: (b, t + start_chunk, 0)),
                pl.BlockSpec((1, tile_t, HW), lambda b, t: (b, t + start_chunk, 0)),
            ],
            out_specs=pl.BlockSpec((8, 128), lambda b, t: (b, t)),
        ),
        compiler_params=pltpu.CompilerParams(
            dimension_semantics=("parallel", "parallel"),
            vmem_limit_bytes=32 * 1024 * 1024),
        cost_estimate=pl.CostEstimate(
            flops=int(B * n_chunks * tile_t * 3 * M),
            transcendentals=0,
            bytes_accessed=int(B * n_chunks * tile_t * bytes_per_t)),
    )(w, pred, gt, valid)
    return jnp.sum(out[0::8, 0::128])


# ------------------------------ plain-JAX glue --------------------------------

def quat2mat(q):
    q = q / jnp.linalg.norm(q)
    w, x, y, z = q[0], q[1], q[2], q[3]
    return jnp.array([
        [1 - 2 * y * y - 2 * z * z, 2 * x * y - 2 * z * w, 2 * x * z + 2 * y * w, 0.0],
        [2 * x * y + 2 * z * w, 1 - 2 * x * x - 2 * z * z, 2 * y * z - 2 * x * w, 0.0],
        [2 * x * z - 2 * y * w, 2 * y * z + 2 * x * w, 1 - 2 * x * x - 2 * y * y, 0.0],
        [0.0, 0.0, 0.0, 1.0]], dtype=jnp.float32)


def tvector2mat(t):
    return jnp.eye(4, dtype=jnp.float32).at[0:3, 3].set(t)


def quaternion_distance(q, r):
    """2*atan2(||vec(q * conj(r))||, |scalar(q * conj(r))|), per batch row."""
    rinv = r * jnp.array([1.0, -1.0, -1.0, -1.0], dtype=r.dtype)   # quatinv
    q0, q1, q2, q3 = q[:, 0], q[:, 1], q[:, 2], q[:, 3]
    r0, r1, r2, r3 = rinv[:, 0], rinv[:, 1], rinv[:, 2], rinv[:, 3]
    t0 = r0 * q0 - r1 * q1 - r2 * q2 - r3 * q3
    t1 = r0 * q1 + r1 * q0 - r2 * q3 + r3 * q2
    t2 = r0 * q2 + r1 * q3 + r2 * q0 - r3 * q1
    t3 = r0 * q3 - r1 * q2 + r2 * q1 + r3 * q0
    return 2.0 * jnp.arctan2(jnp.sqrt(t1 * t1 + t2 * t2 + t3 * t3), jnp.abs(t0))


def smooth_l1(pred, target):
    d = jnp.abs(pred - target)
    return jnp.where(d < 1.0, 0.5 * d * d, d - 0.5)


class CombinedLoss:
    def __init__(self, rescale_trans, rescale_rot, weight_point_cloud):
        self.rescale_trans = rescale_trans
        self.rescale_rot = rescale_rot
        self.weight_point_cloud = 0.5     # matches reference __init__ (arg ignored)
        self.weight_pose = 0.5
        self.weight_flow = 0.5
        self.gamma = 0.8
        self.loss = {}

    def __call__(self, point_clouds, target_transl, target_rot, transl_err,
                 rot_err, calib_flow_pred, calib_flow_gt, flow_valid):
        B = target_transl.shape[0]

        loss_transl = 0.0
        if self.rescale_trans != 0.0:
            loss_transl = smooth_l1(transl_err, target_transl).sum(axis=1).mean()
        loss_rot = 0.0
        if self.rescale_rot != 0.0:
            loss_rot = quaternion_distance(rot_err, target_rot).mean()
        pose_loss = self.rescale_trans * loss_transl + self.rescale_rot * loss_rot

        # Per-batch A = inv(RT_total) - I (rotate_forward applies the inverse
        # transform); tiny 4x4 linear algebra -> plain JAX glue.
        def make_a(tt, tr, et, er):
            rt_target = tvector2mat(tt) @ quat2mat(tr)
            rt_pred = tvector2mat(et) @ quat2mat(er)
            rt_total = jnp.linalg.inv(rt_target) @ rt_pred
            return jnp.linalg.inv(rt_total) - jnp.eye(4, dtype=jnp.float32)
        a_minus_i = jax.vmap(make_a)(target_transl, target_rot, transl_err, rot_err)

        # error.clamp(100.0) in the reference is not in-place -> no-op.
        pc_loss_sum = point_cloud_loss(a_minus_i, point_clouds)        # Pallas

        Bf, T, C, H, W = calib_flow_pred.shape
        # Free, copy-less reshapes (contiguous trailing dims); no transposes.
        pred3 = calib_flow_pred.reshape(Bf, T, C * H * W)
        gt3 = calib_flow_gt.reshape(Bf, T, C * H * W)
        valid3 = flow_valid.reshape(Bf, T, H * W)
        if valid3.dtype != jnp.float32:
            valid3 = valid3.astype(jnp.float32)
        # gamma**(T-1-i) in float64 then cast to f32 (early terms underflow to
        # 0, same as the python-float * float32-tensor path in torch).
        weights = np.power(self.gamma, (T - 1) - np.arange(T)).astype(np.float32)
        flow_loss = flow_loss_fn(weights, pred3, gt3, valid3,
                                 channels=C, numel=Bf * C * H * W)      # Pallas

        point_clouds_loss = pc_loss_sum / B
        total_loss = (self.weight_pose * pose_loss
                      + self.weight_point_cloud * point_clouds_loss
                      + self.weight_flow * flow_loss)
        self.loss = {
            'total_loss': total_loss,
            'transl_loss': loss_transl,
            'rot_loss': loss_rot,
            'point_clouds_loss': point_clouds_loss,
            'flow_loss': flow_loss,
        }
        return self.loss


if __name__ == "__main__":
    key = jax.random.PRNGKey(0)
    k = jax.random.split(key, 8)

    B, N = 2, 256                    # batch, points per cloud
    T, C, H, W = 1000, 2, 8, 8       # flow: 1000 iterative predictions, 2-ch flow

    target_transl = jax.random.normal(k[0], (B, 3), jnp.float32) * 0.1
    target_rot = jax.random.normal(k[1], (B, 4), jnp.float32)
    target_rot = target_rot / jnp.linalg.norm(target_rot, axis=1, keepdims=True)
    transl_err = jax.random.normal(k[2], (B, 3), jnp.float32) * 0.1
    rot_err = jax.random.normal(k[3], (B, 4), jnp.float32)
    rot_err = rot_err / jnp.linalg.norm(rot_err, axis=1, keepdims=True)

    pc_xyz = jax.random.normal(k[4], (B, 3, N), jnp.float32) * 5.0
    point_clouds = jnp.concatenate(
        [pc_xyz, jnp.ones((B, 1, N), jnp.float32)], axis=1)   # (B, 4, N) homogeneous

    calib_flow_pred = jax.random.normal(k[5], (B, T, C, H, W), jnp.float32)
    calib_flow_gt = jax.random.normal(k[6], (B, T, C, H, W), jnp.float32)
    flow_valid = (jax.random.uniform(k[7], (B, T, 1, H, W)) > 0.2).astype(jnp.float32)

    loss_fn = CombinedLoss(rescale_trans=1.0, rescale_rot=1.0, weight_point_cloud=0.5)
    out = loss_fn(point_clouds, target_transl, target_rot, transl_err, rot_err,
                  calib_flow_pred, calib_flow_gt, flow_valid)
    jax.block_until_ready(out['total_loss'])
    print("KERNEL_OK")
</pallas_src>

<mosaic_0001>
module attributes {stable_mosaic.version = 11 : i64} {
  func.func @_pc_kernel(%arg0: i32, %arg1: i32, %arg2: memref<1x4x4xf32, #tpu.memory_space<vmem>>, %arg3: memref<1x4x256xf32, #tpu.memory_space<vmem>>, %arg4: memref<8x128xf32, #tpu.memory_space<vmem>>) attributes {dimension_semantics = [#tpu.dimension_semantics<parallel>, #tpu.dimension_semantics<parallel>], iteration_bounds = array<i64: 2, 1>, scalar_prefetch = 0 : i64, scratch_operands = 0 : i64, tpu.core_type = #tpu.core_type<tc>, window_params = [{transform_indices = @transform_0, window_bounds = array<i64: 1, 4, 4>}, {transform_indices = @transform_1, window_bounds = array<i64: 1, 4, 256>}, {transform_indices = @transform_2, window_bounds = array<i64: 8, 128>}]} {
    %c0 = arith.constant 0 : index
    %c0_0 = arith.constant 0 : index
    %c0_1 = arith.constant 0 : index
    %0 = vector.load %arg2[%c0, %c0_0, %c0_1] : memref<1x4x4xf32, #tpu.memory_space<vmem>>, vector<1x4x4xf32>
    %1 = vector.shape_cast %0 : vector<1x4x4xf32> to vector<4x4xf32>
    %c0_2 = arith.constant 0 : index
    %c0_3 = arith.constant 0 : index
    %c0_4 = arith.constant 0 : index
    %2 = vector.load %arg3[%c0_2, %c0_3, %c0_4] : memref<1x4x256xf32, #tpu.memory_space<vmem>>, vector<1x4x256xf32>
    %3 = vector.shape_cast %2 : vector<1x4x256xf32> to vector<4x256xf32>
    %4 = vector.extract_strided_slice %1 {offsets = [0, 0], sizes = [4, 1], strides = [1, 1]} : vector<4x4xf32> to vector<4x1xf32>
    %5 = vector.extract_strided_slice %3 {offsets = [0, 0], sizes = [1, 256], strides = [1, 1]} : vector<4x256xf32> to vector<1x256xf32>
    %6 = vector.broadcast %4 : vector<4x1xf32> to vector<4x256xf32>
    %7 = vector.broadcast %5 : vector<1x256xf32> to vector<4x256xf32>
    %8 = arith.mulf %6, %7 : vector<4x256xf32>
    %9 = vector.extract_strided_slice %1 {offsets = [0, 1], sizes = [4, 1], strides = [1, 1]} : vector<4x4xf32> to vector<4x1xf32>
    %10 = vector.extract_strided_slice %3 {offsets = [1, 0], sizes = [1, 256], strides = [1, 1]} : vector<4x256xf32> to vector<1x256xf32>
    %11 = vector.broadcast %9 : vector<4x1xf32> to vector<4x256xf32>
    %12 = vector.broadcast %10 : vector<1x256xf32> to vector<4x256xf32>
    %13 = arith.mulf %11, %12 : vector<4x256xf32>
    %14 = arith.addf %8, %13 : vector<4x256xf32>
    %15 = vector.extract_strided_slice %1 {offsets = [0, 2], sizes = [4, 1], strides = [1, 1]} : vector<4x4xf32> to vector<4x1xf32>
    %16 = vector.extract_strided_slice %3 {offsets = [2, 0], sizes = [1, 256], strides = [1, 1]} : vector<4x256xf32> to vector<1x256xf32>
    %17 = vector.broadcast %15 : vector<4x1xf32> to vector<4x256xf32>
    %18 = vector.broadcast %16 : vector<1x256xf32> to vector<4x256xf32>
    %19 = arith.mulf %17, %18 : vector<4x256xf32>
    %20 = arith.addf %14, %19 : vector<4x256xf32>
    %21 = vector.extract_strided_slice %1 {offsets = [0, 3], sizes = [4, 1], strides = [1, 1]} : vector<4x4xf32> to vector<4x1xf32>
    %22 = vector.extract_strided_slice %3 {offsets = [3, 0], sizes = [1, 256], strides = [1, 1]} : vector<4x256xf32> to vector<1x256xf32>
    %23 = vector.broadcast %21 : vector<4x1xf32> to vector<4x256xf32>
    %24 = vector.broadcast %22 : vector<1x256xf32> to vector<4x256xf32>
    %25 = arith.mulf %23, %24 : vector<4x256xf32>
    %26 = arith.addf %20, %25 : vector<4x256xf32>
    %27 = vector.extract_strided_slice %26 {offsets = [0, 0], sizes = [1, 256], strides = [1, 1]} : vector<4x256xf32> to vector<1x256xf32>
    %28 = vector.extract_strided_slice %26 {offsets = [1, 0], sizes = [1, 256], strides = [1, 1]} : vector<4x256xf32> to vector<1x256xf32>
    %29 = vector.extract_strided_slice %26 {offsets = [2, 0], sizes = [1, 256], strides = [1, 1]} : vector<4x256xf32> to vector<1x256xf32>
    %30 = arith.mulf %27, %27 : vector<1x256xf32>
    %31 = arith.mulf %28, %28 : vector<1x256xf32>
    %32 = arith.addf %30, %31 : vector<1x256xf32>
    %33 = arith.mulf %29, %29 : vector<1x256xf32>
    %34 = arith.addf %32, %33 : vector<1x256xf32>
    %35 = math.sqrt %34 : vector<1x256xf32>
    %cst = arith.constant dense<0.000000e+00> : vector<1xf32>
    %36 = vector.multi_reduction <add>, %35, %cst [1] : vector<1x256xf32> to vector<1xf32>
    %37 = vector.shape_cast %36 : vector<1xf32> to vector<1x1xf32>
    %cst_5 = arith.constant 3.906250e-03 : f32
    %38 = vector.broadcast %cst_5 : f32 to vector<1x1xf32>
    %39 = arith.mulf %37, %38 : vector<1x1xf32>
    %40 = vector.shape_cast %39 : vector<1x1xf32> to vector<1x1xf32>
    %41 = vector.broadcast %40 : vector<1x1xf32> to vector<8x128xf32>
    %c0_6 = arith.constant 0 : index
    %c0_7 = arith.constant 0 : index
    %42 = vector.load %arg4[%c0_6, %c0_7] : memref<8x128xf32, #tpu.memory_space<vmem>>, vector<8x128xf32>
    tpu.vector_store %arg4[%c0_6, %c0_7], %41 {strides = array<i32>} : memref<8x128xf32, #tpu.memory_space<vmem>>, vector<8x128xf32>,
    return
  }
  func.func @transform_0(%arg0: i32, %arg1: i32) -> (i32, i32, i32) {
    %c0_i32 = arith.constant 0 : i32
    %c0_i32_0 = arith.constant 0 : i32
    %c0_i32_1 = arith.constant 0 : i32
    return %arg0, %c0_i32, %c0_i32_0 : i32, i32, i32
  }
  func.func @transform_1(%arg0: i32, %arg1: i32) -> (i32, i32, i32) {
    %c0_i32 = arith.constant 0 : i32
    %c0_i32_0 = arith.constant 0 : i32
    return %arg0, %c0_i32, %arg1 : i32, i32, i32
  }
  func.func @transform_2(%arg0: i32, %arg1: i32) -> (i32, i32) {
    %c0_i32 = arith.constant 0 : i32
    return %arg0, %arg1 : i32, i32
  }
}

</mosaic_0001>

<llo_original>
// kernel: tpu_custom_call.1
$region0: #{tpu_custom_call.1}
  #allocation0 [shape = 'u32[]', space=smem, size = 0x4, offset = 0x4, fixed_abs, tag = 'smem constant byte address 0x4 - core index']
  #allocation1 [shape = 'u32[144,128]{1,0:T(1,128)}', space=vmem, size = 0x12000, scoped, tag = 'internal scratch']
  %s0 = inlined_call_operand.hbm [shape: f32[2,4,4], index: 0, kind: input, shape index: {}]
  %s1 = inlined_call_operand.hbm [shape: f32[2,4,256], index: 1, kind: input, shape index: {}]
  %s2 = inlined_call_operand.hbm [shape: f32[16,128], index: 2, kind: output, shape index: {}]
  %s3 = sld [smem:[#allocation0]]
  $region49: #{tpu_custom_call.1} parent=0
    _
  %s5 = ssub.s32 1, %s3
  %s6 = scalar_select 0, %s5, %s3
  $region1: #{tpu_custom_call.1} parent=0
    #allocation2 [shape = 'u8[4096]{0}', space=vmem, size = 0x1000, scoped, tag = 'input window, operand 0']
    #allocation3 [shape = 's32[2]{0}', space=sflag, size = 0x8, scoped, tag = 'scoped memory for tpu_custom_call.1']
    #allocation4 [shape = 's32[2]{0}', space=sflag, size = 0x8, scoped, tag = 'scoped memory for tpu_custom_call.1']
    #allocation5 [shape = 'u8[8192]{0}', space=vmem, size = 0x2000, scoped, tag = 'input window, operand 1']
    #allocation6 [shape = 's32[2]{0}', space=sflag, size = 0x8, scoped, tag = 'scoped memory for tpu_custom_call.1']
    #allocation7 [shape = 'u8[8192]{0}', space=vmem, size = 0x2000, scoped, tag = 'output window, operand 0']
    %7 = vsyncpa [#allocation3], 0
    %s8 = scalar_lea.sflag [#allocation3], 1
    %9 = vsyncpa %s8, 0
    %10 = vsyncpa [#allocation6], 0
    %s11 = scalar_lea.sflag [#allocation6], 1
    %12 = vsyncpa %s11, 0
    %13 = vsyncpa [#allocation4], 0
    %s14 = scalar_lea.sflag [#allocation4], 1
    %15 = vsyncpa %s14, 0
    loop: start=0, step=1, limit=4
    $region2: #{tpu_custom_call.1} parent=1 // loop_pre_header
      _
    $region3: #{tpu_custom_call.1} parent=1 // loop_header
      %s17 = sphi 0, %s21
      %p18 = scmp.ge.s32.totalorder %s17, 4
      %s24 = sphi 0, %s36
      %s25 = sphi 0, %s32
      %s26 = sphi 0, %s24
      %s27 = sphi 0, %s25
      %s28 = sphi 0, %s26
      %s29 = sphi 0, %s27
      %s39 = sphi 0, %s41
      %s42 = sphi 0, %s39
      %s43 = sphi 0, %s42
      %s59 = sphi 0, %s43
      %s67 = sphi 0, %s69
      %s70 = sphi 0, %s67
      %s71 = sphi 0, %s70
      %s87 = sphi 0, %s71
      %s95 = sphi 0, %s97
      %s98 = sphi 0, %s95
      %s99 = sphi 0, %s98
      %s115 = sphi 0, %s99
    $region4: #{tpu_custom_call.1} parent=1 // loop_header_branch
      %20 = sbr.rel (%p18) target = $region8
    $region5: #{tpu_custom_call.1} parent=1 // loop_body
      %s22 = ssub.s32 %s17, 1
      %s23 = ssub.s32 %s17, 2
      %s30 = sadd.s32 1, %s25
      %p31 = scmp.ge.s32.totalorder %s30, 1
      %s32 = scalar_select %p31, 0, %s30
      %s33 = sadd.s32 1, %s24
      %s34 = scalar_select %p31, %s33, %s24
      %p35 = scmp.ge.s32.totalorder %s34, 2
      %s36 = scalar_select %p35, 0, %s34
      %s37 = ssub.s32 %s24, %s36
      %p38 = scmp.eq.s32.totalorder %s37, 0
      %s40 = sadd.s32 %s39, 1
      %s41 = scalar_select %p38, %s39, %s40
      %p44 = pneg %p38
      %p45 = scmp.eq.s32.totalorder %s17, 1
      %p46 = por %p44, %p45
      %p47 = scmp.ne.s32.totalorder %s39, %s42
      %p48 = scmp.eq.s32.totalorder %s17, 0
      %p49 = por %p47, %p48
      %p50 = scmp.ne.s32.totalorder %s39, %s42
      %p51 = scmp.eq.s32.totalorder %s22, 1
      %p52 = por %p50, %p51
      %p53 = scmp.ne.s32.totalorder %s42, %s43
      %p54 = scmp.eq.s32.totalorder %s22, 0
      %p55 = por %p53, %p54
      %p56 = scmp.ne.s32.totalorder %s42, %s43
      %p57 = scmp.eq.s32.totalorder %s23, 1
      %p58 = por %p56, %p57
      %p60 = scmp.ne.s32.totalorder %s43, %s59
      %p61 = scmp.eq.s32.totalorder %s23, 0
      %p62 = por %p60, %p61
      %s63 = ssub.s32 %s24, %s36
      %s64 = ssub.s32 %s25, %s32
      %s65 = sor.u32 %s63, %s64
      %p66 = scmp.eq.s32.totalorder %s65, 0
      %s68 = sadd.s32 %s67, 1
      %s69 = scalar_select %p66, %s67, %s68
      %p72 = pneg %p66
      %p73 = scmp.eq.s32.totalorder %s17, 1
      %p74 = por %p72, %p73
      %p75 = scmp.ne.s32.totalorder %s67, %s70
      %p76 = scmp.eq.s32.totalorder %s17, 0
      %p77 = por %p75, %p76
      %p78 = scmp.ne.s32.totalorder %s67, %s70
      %p79 = scmp.eq.s32.totalorder %s22, 1
      %p80 = por %p78, %p79
      %p81 = scmp.ne.s32.totalorder %s70, %s71
      %p82 = scmp.eq.s32.totalorder %s22, 0
      %p83 = por %p81, %p82
      %p84 = scmp.ne.s32.totalorder %s70, %s71
      %p85 = scmp.eq.s32.totalorder %s23, 1
      %p86 = por %p84, %p85
      %p88 = scmp.ne.s32.totalorder %s71, %s87
      %p89 = scmp.eq.s32.totalorder %s23, 0
      %p90 = por %p88, %p89
      %s91 = ssub.s32 %s24, %s36
      %s92 = ssub.s32 %s25, %s32
      %s93 = sor.u32 %s91, %s92
      %p94 = scmp.eq.s32.totalorder %s93, 0
      %s96 = sadd.s32 %s95, 1
      %s97 = scalar_select %p94, %s95, %s96
      %p100 = pneg %p94
      %p101 = scmp.eq.s32.totalorder %s17, 1
      %p102 = por %p100, %p101
      %p103 = scmp.ne.s32.totalorder %s95, %s98
      %p104 = scmp.eq.s32.totalorder %s17, 0
      %p105 = por %p103, %p104
      %p106 = scmp.ne.s32.totalorder %s95, %s98
      %p107 = scmp.eq.s32.totalorder %s22, 1
      %p108 = por %p106, %p107
      %p109 = scmp.ne.s32.totalorder %s98, %s99
      %p110 = scmp.eq.s32.totalorder %s22, 0
      %p111 = por %p109, %p110
      %p112 = scmp.ne.s32.totalorder %s98, %s99
      %p113 = scmp.eq.s32.totalorder %s23, 1
      %p114 = por %p112, %p113
      %p116 = scmp.ne.s32.totalorder %s99, %s115
      %p117 = scmp.eq.s32.totalorder %s23, 0
      %p118 = por %p116, %p117
      %p119 = scmp.le.s32.totalorder 1, %s17
      %p120 = scmp.lt.s32.totalorder %s17, 3
      %p121 = pnand %p119, %p120
      %p122 = pneg %p121
      // Predicated region
      $region9: #{tpu_custom_call.1} parent=5 // pred_check
        _
      $region10: #{tpu_custom_call.1} parent=5 // pred_check_branch
        %124 = sbr.rel (%p121) target = $region12
      $region11: #{tpu_custom_call.1} parent=5 // pred_region
        %s125 = ssub.s32 %s17, 1
      $region12: #{tpu_custom_call.1} parent=5 // pred_fallthru
        _
      %p126 = scmp.lt.s32.totalorder %s17, 2
      // Predicated region
      $region13: #{tpu_custom_call.1} parent=5 // pred_check
        %p127 = pneg %p126
      $region14: #{tpu_custom_call.1} parent=5 // pred_check_branch
        %129 = sbr.rel (%p127) target = $region16
      $region15: #{tpu_custom_call.1} parent=5 // pred_region
        // Predicated region
        $region17: #{tpu_custom_call.1} parent=15 // pred_check
          %p130 = pneg %p49
        $region18: #{tpu_custom_call.1} parent=15 // pred_check_branch
          %132 = sbr.rel (%p130) target = $region20
        $region19: #{tpu_custom_call.1} parent=15 // pred_region
          %s133 = sand.u32 %s39, 1
          %s134 = scalar_lea.sflag [#allocation3], %s133
          %s135 = sand.u32 %s39, 1
          %s136 = smul.addr %s135, 4
          %s137 = scalar_lea.vmem [#allocation2], %s136
          %s139 = ssub.s32 64, 64
          %140 = vsyncadd %s134, %s139
          %s141 = smul.addr %s24, 64
          %s142 = scalar_lea.hbm %s0, %s141
          %s144 = sshll.u32 %s137, 4
          %s145 = int_to_ptr.vmem [resolvable:$true] %s144
          %147 = dma.hbm_to_vmem [thread:$0]  %s142, 64, %s145, %s134
        $region20: #{tpu_custom_call.1} parent=15 // pred_fallthru
          _
        // Predicated region
        $region21: #{tpu_custom_call.1} parent=15 // pred_check
          %p148 = pneg %p77
        $region22: #{tpu_custom_call.1} parent=15 // pred_check_branch
          %150 = sbr.rel (%p148) target = $region24
        $region23: #{tpu_custom_call.1} parent=15 // pred_region
          %s151 = sand.u32 %s67, 1
          %s152 = scalar_lea.sflag [#allocation6], %s151
          %s153 = sand.u32 %s67, 1
          %s154 = smul.addr %s153, 8
          %s155 = scalar_lea.vmem [#allocation5], %s154
          %s156 = smul.u32 2, %s25
          %s158 = ssub.s32 128, 128
          %159 = vsyncadd %s152, %s158
          %s160 = smul.addr %s24, 2
          %s161 = sadd.s32 %s156, %s160
          %s162 = smul.addr %s161, 64
          %s163 = scalar_lea.hbm %s1, %s162
          %s165 = sshll.u32 %s155, 4
          %s166 = int_to_ptr.vmem [resolvable:$true] %s165
          %168 = dma.hbm_to_vmem [thread:$0]  %s163, 128, %s166, %s152
        $region24: #{tpu_custom_call.1} parent=15 // pred_fallthru
          _
      $region16: #{tpu_custom_call.1} parent=5 // pred_fallthru
        _
      %p169 = scmp.le.s32.totalorder 1, %s17
      %p170 = scmp.lt.s32.totalorder %s17, 3
      %p171 = pnand %p169, %p170
      %p172 = pneg %p171
      // Predicated region
      $region25: #{tpu_custom_call.1} parent=5 // pred_check
        _
      $region26: #{tpu_custom_call.1} parent=5 // pred_check_branch
        %174 = sbr.rel (%p171) target = $region28
      $region27: #{tpu_custom_call.1} parent=5 // pred_region
        %s175 = ssub.s32 %s17, 1
        %s176 = sand.u32 %s42, 1
        %s177 = scalar_lea.sflag [#allocation3], %s176
        %s178 = sand.u32 %s42, 1
        %s179 = smul.addr %s178, 4
        %s180 = scalar_lea.vmem [#allocation2], %s179
        // Predicated region
        $region29: #{tpu_custom_call.1} parent=27 // pred_check
          %p181 = pneg %p55
        $region30: #{tpu_custom_call.1} parent=27 // pred_check_branch
          %183 = sbr.rel (%p181) target = $region32
        $region31: #{tpu_custom_call.1} parent=27 // pred_region
          %184 = dma.done %s177, 64
        $region32: #{tpu_custom_call.1} parent=27 // pred_fallthru
          _
        %s185 = sand.u32 %s70, 1
        %s186 = scalar_lea.sflag [#allocation6], %s185
        %s187 = sand.u32 %s70, 1
        %s188 = smul.addr %s187, 8
        %s189 = scalar_lea.vmem [#allocation5], %s188
        // Predicated region
        $region33: #{tpu_custom_call.1} parent=27 // pred_check
          %p190 = pneg %p83
        $region34: #{tpu_custom_call.1} parent=27 // pred_check_branch
          %192 = sbr.rel (%p190) target = $region36
        $region35: #{tpu_custom_call.1} parent=27 // pred_region
          %193 = dma.done %s186, 128
        $region36: #{tpu_custom_call.1} parent=27 // pred_fallthru
          _
        %s194 = sand.u32 %s42, 1
        %s195 = scalar_lea.sflag [#allocation3], %s194
        %s196 = sand.u32 %s42, 1
        %s197 = smul.addr %s196, 4
        %s198 = scalar_lea.vmem [#allocation2], %s197
        %p199 = pneg %p55
        %p200 = pneg %p52
        %s201 = sand.u32 %s70, 1
        %s202 = scalar_lea.sflag [#allocation6], %s201
        %s203 = sand.u32 %s70, 1
        %s204 = smul.addr %s203, 8
        %s205 = scalar_lea.vmem [#allocation5], %s204
        %p206 = pneg %p83
        %p207 = pneg %p80
        %p208 = pneg %p111
        %p209 = pneg %p108
        %s210 = sand.u32 %s98, 1
        %s211 = scalar_lea.sflag [#allocation4], %s210
        %s212 = sand.u32 %s98, 1
        %s213 = smul.addr %s212, 8
        %s214 = scalar_lea.vmem [#allocation7], %s213
        %s215 = smul.u32 2, %s27
        %v216 = vld [vmem:[%s180] sm:$0xf]
        %v217 = vld [vmem:[%s189] sm:$0xff]
        %219 = vset.pattern.permute.xlu0 0
        %220 = vperm.xlu0 %219, %v216
        %v221 = vpop.permute.xlu0 %220
        %v224 = vlaneseq
        %v225 = vshrl.u32 %v224, 7
        %v226 = vsub.s32 0, %v225
        %v227 = vrot.slane %v217, %v226
        %v228 = vlaneseq
        %v229 = vshrl.u32 %v228, 7
        %v230 = vsub.s32 4, %v229
        %v231 = vrot.slane %v217, %v230
        %v234 = vlaneseq
        %v235 = vshrl.u32 %v234, 7
        %v236 = vsub.s32 0, %v235
        %v237 = vrot.slane %v227, %v236
        %v238 = vlaneseq
        %v239 = vshrl.u32 %v238, 7
        %v240 = vsub.s32 0, %v239
        %v241 = vrot.slane %v231, %v240
        %v242 = vmul.f32 %v221, %v237
        %v243 = vmul.f32 %v221, %v241
        %244 = vset.pattern.permute.xlu0 1
        %245 = vperm.xlu0 %244, %v216
        %v246 = vpop.permute.xlu0 %245
        %v248 = vlaneseq
        %v249 = vshrl.u32 %v248, 7
        %v250 = vsub.s32 1, %v249
        %v251 = vrot.slane %v217, %v250
        %v252 = vlaneseq
        %v253 = vshrl.u32 %v252, 7
        %v254 = vsub.s32 5, %v253
        %v255 = vrot.slane %v217, %v254
        %v258 = vlaneseq
        %v259 = vshrl.u32 %v258, 7
        %v260 = vsub.s32 1, %v259
        %v261 = vrot.slane %v251, %v260
        %v262 = vlaneseq
        %v263 = vshrl.u32 %v262, 7
        %v264 = vsub.s32 1, %v263
        %v265 = vrot.slane %v255, %v264
        %v266 = vmul.f32 %v246, %v261
        %v267 = vmul.f32 %v246, %v265
        %v268 = vadd.f32 %v242, %v266
        %v269 = vadd.f32 %v243, %v267
        %270 = vset.pattern.permute.xlu0 2
        %271 = vperm.xlu0 %270, %v216
        %v272 = vpop.permute.xlu0 %271
        %v274 = vlaneseq
        %v275 = vshrl.u32 %v274, 7
        %v276 = vsub.s32 2, %v275
        %v277 = vrot.slane %v217, %v276
        %v278 = vlaneseq
        %v279 = vshrl.u32 %v278, 7
        %v280 = vsub.s32 6, %v279
        %v281 = vrot.slane %v217, %v280
        %v284 = vlaneseq
        %v285 = vshrl.u32 %v284, 7
        %v286 = vsub.s32 2, %v285
        %v287 = vrot.slane %v277, %v286
        %v288 = vlaneseq
        %v289 = vshrl.u32 %v288, 7
        %v290 = vsub.s32 2, %v289
        %v291 = vrot.slane %v281, %v290
        %v292 = vmul.f32 %v272, %v287
        %v293 = vmul.f32 %v272, %v291
        %v294 = vadd.f32 %v268, %v292
        %v295 = vadd.f32 %v269, %v293
        %296 = vset.pattern.permute.xlu0 3
        %297 = vperm.xlu0 %296, %v216
        %v298 = vpop.permute.xlu0 %297
        %v300 = vlaneseq
        %v301 = vshrl.u32 %v300, 7
        %v302 = vsub.s32 3, %v301
        %v303 = vrot.slane %v217, %v302
        %v304 = vlaneseq
        %v305 = vshrl.u32 %v304, 7
        %v306 = vsub.s32 7, %v305
        %v307 = vrot.slane %v217, %v306
        %v310 = vlaneseq
        %v311 = vshrl.u32 %v310, 7
        %v312 = vsub.s32 3, %v311
        %v313 = vrot.slane %v303, %v312
        %v314 = vlaneseq
        %v315 = vshrl.u32 %v314, 7
        %v316 = vsub.s32 3, %v315
        %v317 = vrot.slane %v307, %v316
        %v318 = vmul.f32 %v298, %v313
        %v319 = vmul.f32 %v298, %v317
        %v320 = vadd.f32 %v294, %v318
        %v321 = vadd.f32 %v295, %v319
        %v322 = vmul.f32 %v320, %v320
        %v323 = vmul.f32 %v321, %v321
        %v326 = vrot.slane %v322, 1
        %v327 = vrot.slane %v323, 1
        %v330 = vadd.f32 %v322, %v326
        %v331 = vadd.f32 %v323, %v327
        %v332 = vrot.slane %v322, 2
        %v333 = vrot.slane %v323, 2
        %v336 = vadd.f32 %v330, %v332
        %v337 = vadd.f32 %v331, %v333
        %v338 = vrsqrt.pop %v336
        %v339 = vmul.f32 %v336, %v338
        %vm340 = vcmp.eq.f32.partialorder %v336, inf
        %v341 = vsel %vm340, %v336, %v339
        %vm342 = vcmp.eq.f32.partialorder %v336, 0.0
        %v343 = vand.u32 %v336, 2147483648
        %v344 = vsel %vm342, %v343, %v341
        %v345 = vrsqrt.pop %v337
        %v346 = vmul.f32 %v337, %v345
        %vm347 = vcmp.eq.f32.partialorder %v337, inf
        %v348 = vsel %vm347, %v337, %v346
        %vm349 = vcmp.eq.f32.partialorder %v337, 0.0
        %v350 = vand.u32 %v337, 2147483648
        %v351 = vsel %vm349, %v350, %v348
        %vm352 = vcmask 1040384
        %v353 = vsel %vm352, %v344, 0.0
        %v354 = vsel %vm352, %v351, 0.0
        %v355 = vadd.f32 %v353, %v354
        %356 = vadd.xlane.f32.xlu0 %v355
        %v357 = vpop.xlane.xlu0 %356
        %v358 = vmul.f32 %v357, 0.00390625
        %v359 = vlaneseq
        %v360 = vshrl.u32 %v359, 7
        %v361 = vsub.s32 0, %v360
        %v362 = vrot.slane %v358, %v361
        %363 = vst [vmem:[%s214] sm:$0xff] %v362
        %s364 = sand.u32 %s98, 1
        %s365 = scalar_lea.sflag [#allocation4], %s364
        %s366 = sand.u32 %s98, 1
        %s367 = smul.addr %s366, 8
        %s368 = scalar_lea.vmem [#allocation7], %s367
        // Predicated region
        $region37: #{tpu_custom_call.1} parent=27 // pred_check
          %p369 = pneg %p108
        $region38: #{tpu_custom_call.1} parent=27 // pred_check_branch
          %371 = sbr.rel (%p369) target = $region40
        $region39: #{tpu_custom_call.1} parent=27 // pred_region
          %s373 = ssub.s32 128, 128
          %374 = vsyncadd %s365, %s373
          %s375 = sadd.s32 %s27, %s26
          %s376 = smul.addr %s375, 128
          %s377 = scalar_lea.hbm %s2, %s376
          %s379 = sshll.u32 %s368, 4
          %s380 = int_to_ptr.vmem [resolvable:$true] %s379
          %382 = dma.vmem_to_hbm [thread:$0]  %s380, 128, %s377, %s365
        $region40: #{tpu_custom_call.1} parent=27 // pred_fallthru
          _
      $region28: #{tpu_custom_call.1} parent=5 // pred_fallthru
        _
      %p383 = scmp.le.s32.totalorder 2, %s17
      // Predicated region
      $region41: #{tpu_custom_call.1} parent=5 // pred_check
        %p384 = pneg %p383
      $region42: #{tpu_custom_call.1} parent=5 // pred_check_branch
        %386 = sbr.rel (%p384) target = $region44
      $region43: #{tpu_custom_call.1} parent=5 // pred_region
        %s387 = ssub.s32 %s17, 2
        // Predicated region
        $region45: #{tpu_custom_call.1} parent=43 // pred_check
          %p388 = pneg %p114
        $region46: #{tpu_custom_call.1} parent=43 // pred_check_branch
          %390 = sbr.rel (%p388) target = $region48
        $region47: #{tpu_custom_call.1} parent=43 // pred_region
          %s391 = sand.u32 %s99, 1
          %s392 = scalar_lea.sflag [#allocation4], %s391
          %s393 = sand.u32 %s99, 1
          %s394 = smul.addr %s393, 8
          %s395 = scalar_lea.vmem [#allocation7], %s394
          %396 = dma.done %s392, 128
        $region48: #{tpu_custom_call.1} parent=43 // pred_fallthru
          _
      $region44: #{tpu_custom_call.1} parent=5 // pred_fallthru
        _
    $region6: #{tpu_custom_call.1} parent=1 // loop_footer
      %s21 = sadd.s32 1, %s17
    $region7: #{tpu_custom_call.1} parent=1 // loop_footer_branch
      %16 = sbr.rel target = $region3
    $region8: #{tpu_custom_call.1} parent=1 // loop_exit
      _
    %397 = vsyncpa [#allocation3], 1
    %s398 = scalar_lea.sflag [#allocation3], 1
    %399 = vsyncpa %s398, 1
    %400 = vsyncpa [#allocation6], 1
    %s401 = scalar_lea.sflag [#allocation6], 1
    %402 = vsyncpa %s401, 1
    %403 = vsyncpa [#allocation4], 1
    %s404 = scalar_lea.sflag [#allocation4], 1
    %405 = vsyncpa %s404, 1

</llo_original>
